<compile_context>
chip_gen: v7x
topology: tpu7x:2x2x1
jax: 0.10.0
libtpu: 0.0.40
codegen_flags: <defaults>
</compile_context>

<pallas_src>
import jax
import jax.numpy as jnp
import numpy as np
from jax.experimental import pallas as pl
from jax.experimental.pallas import tpu as pltpu

# ----------------------------- problem sizes ------------------------------
BATCH = 2
SENT_LEN = 16
EMBED_DIM = 32
KERNEL_SIZE = 3
NUM_FILTER = 64
NUM_CAT = 8

CONV_LEN = SENT_LEN - KERNEL_SIZE + 1            # 14 valid conv output steps
F_PAD = 128                                      # lane-dense padded filter dim
C_PAD = 128                                      # lane-dense padded class dim
B_PAD = 8                                        # sublane-dense padded batch dim


# ------------------------------ Pallas kernel -----------------------------
def cnn_classifier_kernel(x_ref, wconv_ref, bconv_ref, wlin_ref, blin_ref, o_ref):
    # x_ref:     (B*S, E)        activation rows (batch-major, time contiguous)
    # wconv_ref: (K, E, F_PAD)   per-tap conv weights (zero-padded filters)
    # bconv_ref: (1, F_PAD)      conv bias (zero-padded)
    # wlin_ref:  (F_PAD, C_PAD)  linear weight (zero-padded rows/cols)
    # blin_ref:  (1, C_PAD)      linear bias (-1e30 on padded classes)
    # o_ref:     (B_PAD, C_PAD)  log-probs (padded rows/cols are garbage, sliced off)
    x2 = x_ref[...]                                              # (B*S, E)

    # Conv1d over time as K accumulating MXU dots.  Tap k needs row (r + k):
    # shift the activation rows up by k (a tiny in-VMEM sublane rotate built
    # from two static slices).  The wrap-around only touches the last K-1 time
    # steps of each sentence, which are >= CONV_LEN and masked out below.
    h = jnp.dot(x2, wconv_ref[0], preferred_element_type=jnp.float32)  # (B*S, F_PAD)
    for k in range(1, KERNEL_SIZE):
        xk = jnp.concatenate([x2[k:], x2[:k]], axis=0)           # row r -> x2[(r+k) % N]
        h = h + jnp.dot(xk, wconv_ref[k], preferred_element_type=jnp.float32)

    h = jnp.maximum(h + bconv_ref[...], 0.0)                     # bias + ReLU

    # Mask invalid conv positions (t >= CONV_LEN within each sentence).  ReLU
    # output is >= 0, so zeros never win the max-over-time.
    h3 = h.reshape(BATCH, SENT_LEN, F_PAD)                       # (B, S, F_PAD)
    t_idx = jax.lax.broadcasted_iota(jnp.int32, h3.shape, 1)
    h3 = jnp.where(t_idx < CONV_LEN, h3, 0.0)

    # Max-over-time pooling: single axis reduce.
    pooled = jnp.max(h3, axis=1)                                 # (B, F_PAD)

    # Pad the batch rows to a full 8-sublane tile for the head + final store.
    pooled8 = jnp.concatenate(
        [pooled, jnp.zeros((B_PAD - BATCH, F_PAD), jnp.float32)], axis=0)  # (B_PAD, F_PAD)

    # Linear head over lane-padded classes.
    logits = jnp.dot(pooled8, wlin_ref[...],
                     preferred_element_type=jnp.float32) + blin_ref[...]   # (B_PAD, C_PAD)

    # LogSoftmax along the class axis.  Padded classes have bias = -1e30, so
    # exp(logit - m) underflows to 0 and they contribute no mass (no NaNs).
    m = jnp.max(logits, axis=-1, keepdims=True)
    lse = jnp.log(jnp.sum(jnp.exp(logits - m), axis=-1, keepdims=True)) + m
    o_ref[...] = logits - lse


# ------------------------------ host wrapper -------------------------------
@jax.jit
def cnn_classifier(embedded, w_conv, b_conv, w_lin, b_lin):
    """embedded: (B, S, E) f32; w_conv: (K, E, F); b_conv: (F,);
    w_lin: (F, C); b_lin: (C,). Returns log-probs (B, C) f32."""
    B, S, E = embedded.shape

    # Only activation prep: a metadata-only flatten (no duplication, no pad).
    x2 = embedded.reshape(B * S, E)                              # (B*S, E)

    # Lane-dense weight prep (tiny, one-time, fused under jit).
    w_conv_pad = jnp.zeros((KERNEL_SIZE, E, F_PAD), jnp.float32
                           ).at[:, :, :NUM_FILTER].set(w_conv)   # (K, E, F_PAD)
    b_conv_pad = jnp.zeros((1, F_PAD), jnp.float32).at[0, :NUM_FILTER].set(b_conv)
    w_lin_pad = jnp.zeros((F_PAD, C_PAD), jnp.float32
                          ).at[:NUM_FILTER, :NUM_CAT].set(w_lin)  # (F_PAD, C_PAD)
    b_lin_pad = jnp.full((1, C_PAD), -1e30, jnp.float32).at[0, :NUM_CAT].set(b_lin)

    flops = (2 * (B * S) * E * F_PAD * KERNEL_SIZE) + (2 * B_PAD * F_PAD * C_PAD)
    bytes_accessed = 4 * (x2.size + w_conv_pad.size + b_conv_pad.size
                          + w_lin_pad.size + b_lin_pad.size + B_PAD * C_PAD)

    vmem_spec = pl.BlockSpec(memory_space=pltpu.MemorySpace.VMEM)

    out = pl.pallas_call(
        cnn_classifier_kernel,
        out_shape=jax.ShapeDtypeStruct((B_PAD, C_PAD), jnp.float32),
        in_specs=[vmem_spec] * 5,
        out_specs=vmem_spec,
        cost_estimate=pl.CostEstimate(
            flops=flops,
            transcendentals=B_PAD * C_PAD + B_PAD,
            bytes_accessed=bytes_accessed,
        ),
    )(x2, w_conv_pad, b_conv_pad, w_lin_pad, b_lin_pad)

    return out[:B, :NUM_CAT]


# ------------------------------ pure-JAX reference -------------------------
def reference(embedded, w_conv, b_conv, w_lin, b_lin):
    hi = jax.lax.Precision.HIGHEST
    outs = [jnp.einsum("ble,ef->blf", embedded[:, k:k + CONV_LEN, :], w_conv[k],
                       precision=hi)
            for k in range(KERNEL_SIZE)]
    h = sum(outs) + b_conv[None, None, :]              # (B, L, F)
    h = jnp.maximum(h, 0.0)
    pooled = jnp.max(h, axis=1)                        # (B, F)
    logits = jnp.dot(pooled, w_lin, precision=hi) + b_lin[None, :]  # (B, C)
    return jax.nn.log_softmax(logits, axis=1)


# --------------------------------- main ------------------------------------
if __name__ == "__main__":
    key = jax.random.PRNGKey(0)
    k_x, k_wc, k_bc, k_wl, k_bl = jax.random.split(key, 5)

    # "embedded" input: what embed_layer would produce, (B, S, E).
    embedded = jax.random.normal(k_x, (BATCH, SENT_LEN, EMBED_DIM), jnp.float32)

    # Parameters (deterministic init). torch Conv1d weight is (F, E, K);
    # stored as (K, E, F) so each tap is a ready-to-use (E, F) matmul operand.
    w_conv_torch = 0.1 * jax.random.normal(
        k_wc, (NUM_FILTER, EMBED_DIM, KERNEL_SIZE), jnp.float32)
    w_conv = jnp.transpose(w_conv_torch, (2, 1, 0))              # (K, E, F)
    b_conv = 0.1 * jax.random.normal(k_bc, (NUM_FILTER,), jnp.float32)

    # torch Linear weight is (C, F); stored as its transpose (F, C).
    w_lin_torch = 0.1 * jax.random.normal(k_wl, (NUM_CAT, NUM_FILTER), jnp.float32)
    w_lin = w_lin_torch.T                                        # (F, C)
    b_lin = 0.1 * jax.random.normal(k_bl, (NUM_CAT,), jnp.float32)

    out = jax.block_until_ready(cnn_classifier(embedded, w_conv, b_conv, w_lin, b_lin))
    ref = jax.block_until_ready(reference(embedded, w_conv, b_conv, w_lin, b_lin))

    np.testing.assert_allclose(np.asarray(out), np.asarray(ref),
                               rtol=1e-3, atol=1e-3)

    print("KERNEL_OK")
</pallas_src>

<mosaic_0001>
module attributes {stable_mosaic.version = 11 : i64} {
  func.func @cnn_classifier_kernel(%arg0: memref<32x32xf32, #tpu.memory_space<vmem>>, %arg1: memref<3x32x128xf32, #tpu.memory_space<vmem>>, %arg2: memref<1x128xf32, #tpu.memory_space<vmem>>, %arg3: memref<128x128xf32, #tpu.memory_space<vmem>>, %arg4: memref<1x128xf32, #tpu.memory_space<vmem>>, %arg5: memref<8x128xf32, #tpu.memory_space<vmem>>) attributes {dimension_semantics = [], scalar_prefetch = 0 : i64, scratch_operands = 0 : i64, tpu.core_type = #tpu.core_type<tc>} {
    %c0 = arith.constant 0 : index
    %c0_0 = arith.constant 0 : index
    %0 = vector.load %arg0[%c0, %c0_0] : memref<32x32xf32, #tpu.memory_space<vmem>>, vector<32x32xf32>
    %c0_1 = arith.constant 0 : index
    %c0_2 = arith.constant 0 : index
    %c0_3 = arith.constant 0 : index
    %1 = vector.load %arg1[%c0_1, %c0_2, %c0_3] : memref<3x32x128xf32, #tpu.memory_space<vmem>>, vector<1x32x128xf32>
    %2 = vector.shape_cast %1 : vector<1x32x128xf32> to vector<32x128xf32>
    %cst = arith.constant dense<0.000000e+00> : vector<32x128xf32>
    %3 = tpu.matmul %0, %2, %cst {dimension_numbers = #tpu.dot_dimension_numbers<[1], [0], [0], [1], [0, 0, 1, 1], [], []>} : vector<32x32xf32>, vector<32x128xf32>, vector<32x128xf32> -> vector<32x128xf32>
    %4 = vector.extract_strided_slice %0 {offsets = [1, 0], sizes = [31, 32], strides = [1, 1]} : vector<32x32xf32> to vector<31x32xf32>
    %5 = vector.extract_strided_slice %0 {offsets = [0, 0], sizes = [1, 32], strides = [1, 1]} : vector<32x32xf32> to vector<1x32xf32>
    %6 = tpu.concatenate %4, %5 in 0 : vector<31x32xf32>, vector<1x32xf32> -> vector<32x32xf32>
    %c1 = arith.constant 1 : index
    %c0_4 = arith.constant 0 : index
    %c0_5 = arith.constant 0 : index
    %7 = vector.load %arg1[%c1, %c0_4, %c0_5] : memref<3x32x128xf32, #tpu.memory_space<vmem>>, vector<1x32x128xf32>
    %8 = vector.shape_cast %7 : vector<1x32x128xf32> to vector<32x128xf32>
    %cst_6 = arith.constant dense<0.000000e+00> : vector<32x128xf32>
    %9 = tpu.matmul %6, %8, %cst_6 {dimension_numbers = #tpu.dot_dimension_numbers<[1], [0], [0], [1], [0, 0, 1, 1], [], []>} : vector<32x32xf32>, vector<32x128xf32>, vector<32x128xf32> -> vector<32x128xf32>
    %10 = arith.addf %3, %9 : vector<32x128xf32>
    %11 = vector.extract_strided_slice %0 {offsets = [2, 0], sizes = [30, 32], strides = [1, 1]} : vector<32x32xf32> to vector<30x32xf32>
    %12 = vector.extract_strided_slice %0 {offsets = [0, 0], sizes = [2, 32], strides = [1, 1]} : vector<32x32xf32> to vector<2x32xf32>
    %13 = tpu.concatenate %11, %12 in 0 : vector<30x32xf32>, vector<2x32xf32> -> vector<32x32xf32>
    %c2 = arith.constant 2 : index
    %c0_7 = arith.constant 0 : index
    %c0_8 = arith.constant 0 : index
    %14 = vector.load %arg1[%c2, %c0_7, %c0_8] : memref<3x32x128xf32, #tpu.memory_space<vmem>>, vector<1x32x128xf32>
    %15 = vector.shape_cast %14 : vector<1x32x128xf32> to vector<32x128xf32>
    %cst_9 = arith.constant dense<0.000000e+00> : vector<32x128xf32>
    %16 = tpu.matmul %13, %15, %cst_9 {dimension_numbers = #tpu.dot_dimension_numbers<[1], [0], [0], [1], [0, 0, 1, 1], [], []>} : vector<32x32xf32>, vector<32x128xf32>, vector<32x128xf32> -> vector<32x128xf32>
    %17 = arith.addf %10, %16 : vector<32x128xf32>
    %c0_10 = arith.constant 0 : index
    %c0_11 = arith.constant 0 : index
    %18 = vector.load %arg2[%c0_10, %c0_11] : memref<1x128xf32, #tpu.memory_space<vmem>>, vector<1x128xf32>
    %19 = vector.broadcast %18 : vector<1x128xf32> to vector<32x128xf32>
    %20 = arith.addf %17, %19 : vector<32x128xf32>
    %cst_12 = arith.constant 0.000000e+00 : f32
    %21 = vector.broadcast %cst_12 : f32 to vector<32x128xf32>
    %22 = arith.maximumf %20, %21 : vector<32x128xf32>
    %23 = vector.shape_cast %22 : vector<32x128xf32> to vector<2x16x128xf32>
    %24 = tpu.iota {dimensions = array<i32: 1>} : vector<2x16x128xi32>
    %c14_i32 = arith.constant 14 : i32
    %25 = vector.broadcast %c14_i32 : i32 to vector<2x16x128xi32>
    %26 = arith.cmpi slt, %24, %25 : vector<2x16x128xi32>
    %cst_13 = arith.constant 0.000000e+00 : f32
    %27 = vector.broadcast %cst_13 : f32 to vector<2x16x128xf32>
    %28 = arith.select %26, %23, %27 : vector<2x16x128xi1>, vector<2x16x128xf32>
    %cst_14 = arith.constant dense<0xFF800000> : vector<2x128xf32>
    %29 = vector.multi_reduction <maximumf>, %28, %cst_14 [1] : vector<2x16x128xf32> to vector<2x128xf32>
    %cst_15 = arith.constant 0.000000e+00 : f32
    %30 = vector.broadcast %cst_15 : f32 to vector<6x128xf32>
    %31 = tpu.concatenate %29, %30 in 0 : vector<2x128xf32>, vector<6x128xf32> -> vector<8x128xf32>
    %c0_16 = arith.constant 0 : index
    %c0_17 = arith.constant 0 : index
    %32 = vector.load %arg3[%c0_16, %c0_17] : memref<128x128xf32, #tpu.memory_space<vmem>>, vector<128x128xf32>
    %cst_18 = arith.constant dense<0.000000e+00> : vector<8x128xf32>
    %33 = tpu.matmul %31, %32, %cst_18 {dimension_numbers = #tpu.dot_dimension_numbers<[1], [0], [0], [1], [0, 0, 1, 1], [], []>} : vector<8x128xf32>, vector<128x128xf32>, vector<8x128xf32> -> vector<8x128xf32>
    %c0_19 = arith.constant 0 : index
    %c0_20 = arith.constant 0 : index
    %34 = vector.load %arg4[%c0_19, %c0_20] : memref<1x128xf32, #tpu.memory_space<vmem>>, vector<1x128xf32>
    %35 = vector.broadcast %34 : vector<1x128xf32> to vector<8x128xf32>
    %36 = arith.addf %33, %35 : vector<8x128xf32>
    %cst_21 = arith.constant dense<0xFF800000> : vector<8xf32>
    %37 = vector.multi_reduction <maximumf>, %36, %cst_21 [1] : vector<8x128xf32> to vector<8xf32>
    %38 = vector.shape_cast %37 : vector<8xf32> to vector<8x1xf32>
    %39 = vector.broadcast %38 : vector<8x1xf32> to vector<8x128xf32>
    %40 = arith.subf %36, %39 : vector<8x128xf32>
    %41 = math.exp %40 : vector<8x128xf32>
    %cst_22 = arith.constant dense<0.000000e+00> : vector<8xf32>
    %42 = vector.multi_reduction <add>, %41, %cst_22 [1] : vector<8x128xf32> to vector<8xf32>
    %43 = vector.shape_cast %42 : vector<8xf32> to vector<8x1xf32>
    %44 = math.log %43 : vector<8x1xf32>
    %45 = arith.addf %44, %38 : vector<8x1xf32>
    %46 = vector.broadcast %45 : vector<8x1xf32> to vector<8x128xf32>
    %47 = arith.subf %36, %46 : vector<8x128xf32>
    %c0_23 = arith.constant 0 : index
    %c0_24 = arith.constant 0 : index
    %48 = vector.load %arg5[%c0_23, %c0_24] : memref<8x128xf32, #tpu.memory_space<vmem>>, vector<8x128xf32>
    tpu.vector_store %arg5[%c0_23, %c0_24], %47 {strides = array<i32>} : memref<8x128xf32, #tpu.memory_space<vmem>>, vector<8x128xf32>,
    return
  }
}

</mosaic_0001>

<llo_original>
// kernel: cnn_classifier.1
$region0: #{cnn_classifier.1}
  #allocation0 [shape = 'u32[]', space=smem, size = 0x4, offset = 0x4, fixed_abs, tag = 'smem constant byte address 0x4 - core index']
  #allocation1 [shape = 'u32[144,128]{1,0:T(1,128)}', space=vmem, size = 0x12000, scoped, tag = 'internal scratch']
  %s0 = inlined_call_operand.vmem [shape: f32[32,32], index: 0, kind: input, shape index: {}]
  %s1 = inlined_call_operand.vmem [shape: f32[3,32,128], index: 1, kind: input, shape index: {}]
  %s2 = inlined_call_operand.vmem [shape: f32[1,128], index: 2, kind: input, shape index: {}]
  %s3 = inlined_call_operand.vmem [shape: f32[128,128], index: 3, kind: input, shape index: {}]
  %s4 = inlined_call_operand.vmem [shape: f32[1,128], index: 4, kind: input, shape index: {}]
  %s5 = inlined_call_operand.vmem [shape: f32[8,128], index: 5, kind: output, shape index: {}]
  %s6 = sld [smem:[#allocation0]]
  $region30: #{cnn_classifier.1} parent=0
    _
  %s8 = ssub.s32 1, %s6
  %s9 = scalar_select 0, %s8, %s6
  // Predicated region
  $region2: #{cnn_classifier.1} parent=0 // pred_check
    _
  $region3: #{cnn_classifier.1} parent=0 // pred_check_branch
    %11 = sbr.rel (0) target = $region5
  $region4: #{cnn_classifier.1} parent=0 // pred_region
    _
  $region5: #{cnn_classifier.1} parent=0 // pred_fallthru
    _
  // Predicated region
  $region6: #{cnn_classifier.1} parent=0 // pred_check
    _
  $region7: #{cnn_classifier.1} parent=0 // pred_check_branch
    %13 = sbr.rel (0) target = $region9
  $region8: #{cnn_classifier.1} parent=0 // pred_region
    _
  $region9: #{cnn_classifier.1} parent=0 // pred_fallthru
    _
  // Predicated region
  $region10: #{cnn_classifier.1} parent=0 // pred_check
    _
  $region11: #{cnn_classifier.1} parent=0 // pred_check_branch
    %15 = sbr.rel (0) target = $region13
  $region12: #{cnn_classifier.1} parent=0 // pred_region
    _
  $region13: #{cnn_classifier.1} parent=0 // pred_fallthru
    _
  // Predicated region
  $region14: #{cnn_classifier.1} parent=0 // pred_check
    _
  $region15: #{cnn_classifier.1} parent=0 // pred_check_branch
    %17 = sbr.rel (0) target = $region17
  $region16: #{cnn_classifier.1} parent=0 // pred_region
    _
  $region17: #{cnn_classifier.1} parent=0 // pred_fallthru
    _
  // Predicated region
  $region18: #{cnn_classifier.1} parent=0 // pred_check
    _
  $region19: #{cnn_classifier.1} parent=0 // pred_check_branch
    %19 = sbr.rel (0) target = $region21
  $region20: #{cnn_classifier.1} parent=0 // pred_region
    _
  $region21: #{cnn_classifier.1} parent=0 // pred_fallthru
    _
  %v20 = vld [vmem:[%s0] sm:$0xff]
  %v21 = vld [vmem:[%s0 + $0x8] sm:$0xff]
  %v22 = vld [vmem:[%s0 + $0x10] sm:$0xff]
  %v23 = vld [vmem:[%s0 + $0x18] sm:$0xff]
  %v24 = vld [vmem:[%s1] sm:$0xff]
  %v25 = vld [vmem:[%s1 + $0x8] sm:$0xff]
  %v26 = vld [vmem:[%s1 + $0x10] sm:$0xff]
  %v27 = vld [vmem:[%s1 + $0x18] sm:$0xff]
  %vm32 = vcmask 1046528
  %v33 = vrot.slane %v20, 1
  %v34 = vrot.slane %v21, 1
  %v35 = vsel %vm32, %v33, %v34
  %v36 = vrot.slane %v22, 1
  %v37 = vsel %vm32, %v34, %v36
  %v38 = vrot.slane %v23, 1
  %v39 = vsel %vm32, %v36, %v38
  %v42 = vsel %vm32, %v38, %v33
  %s43 = scalar_lea.vmem %s1, 32
  %v44 = vld [vmem:[%s43] sm:$0xff]
  %v45 = vld [vmem:[%s43 + $0x8] sm:$0xff]
  %v46 = vld [vmem:[%s43 + $0x10] sm:$0xff]
  %v47 = vld [vmem:[%s43 + $0x18] sm:$0xff]
  %vm48 = vcmask 261120
  %v49 = vsel %vm48, %v35, 0
  %v51 = vsel %vm48, %v37, 0
  %v53 = vsel %vm48, %v39, 0
  %v56 = vsel %vm48, %v42, 0
  %58 = vmatprep.subr.mxu0 0.0
  %59 = vmatpush1.msra.mxu0 %v44
  %60 = vmatprep.subr.mxu0 0.0
  %61 = vmatpush1.msra.mxu0 %v45
  %62 = vmatprep.subr.mxu0 0.0
  %63 = vmatpush1.msra.mxu0 %v46
  %64 = vmatprep.subr.mxu0 0.0
  %65 = vmatpush1.msra.mxu0 %v47
  %66 = vmatprep.subr.mxu0 0.0
  %67 = vmatpush1.msra.mxu0 0.0
  %68 = vmatprep.subr.mxu0 0.0
  %69 = vmatpush1.msra.mxu0 0.0
  %70 = vmatprep.subr.mxu0 0.0
  %71 = vmatpush1.msra.mxu0 0.0
  %72 = vmatprep.subr.mxu0 0.0
  %73 = vmatpush1.msra.mxu0 0.0
  %74 = vmatprep.subr.mxu0 0.0
  %75 = vmatpush1.msra.mxu0 0.0
  %76 = vmatprep.subr.mxu0 0.0
  %77 = vmatpush1.msra.mxu0 0.0
  %78 = vmatprep.subr.mxu0 0.0
  %79 = vmatpush1.msra.mxu0 0.0
  %80 = vmatprep.subr.mxu0 0.0
  %81 = vmatpush1.msra.mxu0 0.0
  %82 = vmatprep.subr.mxu0 0.0
  %83 = vmatpush1.msra.mxu0 0.0
  %84 = vmatprep.subr.mxu0 0.0
  %85 = vmatpush1.msra.mxu0 0.0
  %86 = vmatprep.subr.mxu0 0.0
  %87 = vmatpush1.msra.mxu0 0.0
  %88 = vmatprep.subr.mxu0 0.0
  %89 = vmatpush1.msra.mxu0 0.0
  %90 = vmatprep.subr.mxu0 0.0
  %91 = vmatpush1.msra.mxu0 0.0
  %92 = vmatprep.subr.mxu0 0.0
  %93 = vmatpush1.msra.mxu0 0.0
  %94 = vmatprep.subr.mxu0 0.0
  %95 = vmatpush1.msra.mxu0 0.0
  %96 = vmatprep.subr.mxu0 0.0
  %97 = vmatpush1.msra.mxu0 0.0
  %98 = vmatprep.subr.mxu0 0.0
  %99 = vmatpush1.msra.mxu0 0.0
  %100 = vmatprep.subr.mxu0 0.0
  %101 = vmatpush1.msra.mxu0 0.0
  %102 = vmatprep.subr.mxu0 0.0
  %103 = vmatpush1.msra.mxu0 0.0
  %104 = vmatprep.subr.mxu0 0.0
  %105 = vmatpush1.msra.mxu0 0.0
  %106 = vmatprep.subr.mxu0 0.0
  %107 = vmatpush1.msra.mxu0 0.0
  %108 = vmatprep.subr.mxu0 0.0
  %109 = vmatpush1.msra.mxu0 0.0
  %110 = vmatprep.subr.mxu0 0.0
  %111 = vmatpush1.msra.mxu0 0.0
  %112 = vmatprep.subr.mxu0 0.0
  %113 = vmatpush1.msra.mxu0 0.0
  %114 = vmatprep.subr.mxu0 0.0
  %115 = vmatpush1.msra.mxu0 0.0
  %116 = vmatprep.subr.mxu0 0.0
  %117 = vmatpush1.msra.mxu0 0.0
  %118 = vmatprep.subr.mxu0 0.0
  %119 = vmatpush1.msra.mxu0 0.0
  %120 = vmatprep.subr.mxu0 0.0
  %121 = vmatpush1.msra.mxu0 0.0
  %122 = vmatprep.mubr.f32.mxu0 0.0
  %123 = vmatmul.mubr.f32.gmra.mrb[0].mxu0 %v49
  %v124 = vpop.f32.mrb[0].mxu0
  %v125 = vadd.f32 0.0, %v124
  %v126 = vpop.f32.mrb[0].mxu0
  %127 = vmatprep.mubr.f32.mxu0 0.0
  %128 = vmatmul.mubr.f32.gmra.mrb[0].mxu0 %v51
  %v129 = vpop.f32.mrb[0].mxu0
  %v130 = vadd.f32 0.0, %v129
  %v131 = vpop.f32.mrb[0].mxu0
  %132 = vmatprep.mubr.f32.mxu0 0.0
  %133 = vmatmul.mubr.f32.gmra.mrb[0].mxu0 %v53
  %v134 = vpop.f32.mrb[0].mxu0
  %v135 = vadd.f32 0.0, %v134
  %v136 = vpop.f32.mrb[0].mxu0
  %137 = vmatprep.mubr.f32.mxu0 0.0
  %138 = vmatmul.mubr.f32.gmra.mrb[0].mxu0 %v56
  %v139 = vpop.f32.mrb[0].mxu0
  %v140 = vadd.f32 0.0, %v139
  %v141 = vpop.f32.mrb[0].mxu0
  %142 = vdwg.mxu0
  %v143 = vsel %vm48, %v20, 0
  %v145 = vsel %vm48, %v21, 0
  %v147 = vsel %vm48, %v22, 0
  %v149 = vsel %vm48, %v23, 0
  %151 = vmatprep.subr.mxu0 0.0
  %152 = vmatpush1.msra.mxu0 %v24
  %153 = vmatprep.subr.mxu0 0.0
  %154 = vmatpush1.msra.mxu0 %v25
  %155 = vmatprep.subr.mxu0 0.0
  %156 = vmatpush1.msra.mxu0 %v26
  %157 = vmatprep.subr.mxu0 0.0
  %158 = vmatpush1.msra.mxu0 %v27
  %159 = vmatprep.subr.mxu0 0.0
  %160 = vmatpush1.msra.mxu0 0.0
  %161 = vmatprep.subr.mxu0 0.0
  %162 = vmatpush1.msra.mxu0 0.0
  %163 = vmatprep.subr.mxu0 0.0
  %164 = vmatpush1.msra.mxu0 0.0
  %165 = vmatprep.subr.mxu0 0.0
  %166 = vmatpush1.msra.mxu0 0.0
  %167 = vmatprep.subr.mxu0 0.0
  %168 = vmatpush1.msra.mxu0 0.0
  %169 = vmatprep.subr.mxu0 0.0
  %170 = vmatpush1.msra.mxu0 0.0
  %171 = vmatprep.subr.mxu0 0.0
  %172 = vmatpush1.msra.mxu0 0.0
  %173 = vmatprep.subr.mxu0 0.0
  %174 = vmatpush1.msra.mxu0 0.0
  %175 = vmatprep.subr.mxu0 0.0
  %176 = vmatpush1.msra.mxu0 0.0
  %177 = vmatprep.subr.mxu0 0.0
  %178 = vmatpush1.msra.mxu0 0.0
  %179 = vmatprep.subr.mxu0 0.0
  %180 = vmatpush1.msra.mxu0 0.0
  %181 = vmatprep.subr.mxu0 0.0
  %182 = vmatpush1.msra.mxu0 0.0
  %183 = vmatprep.subr.mxu0 0.0
  %184 = vmatpush1.msra.mxu0 0.0
  %185 = vmatprep.subr.mxu0 0.0
  %186 = vmatpush1.msra.mxu0 0.0
  %187 = vmatprep.subr.mxu0 0.0
  %188 = vmatpush1.msra.mxu0 0.0
  %189 = vmatprep.subr.mxu0 0.0
  %190 = vmatpush1.msra.mxu0 0.0
  %191 = vmatprep.subr.mxu0 0.0
  %192 = vmatpush1.msra.mxu0 0.0
  %193 = vmatprep.subr.mxu0 0.0
  %194 = vmatpush1.msra.mxu0 0.0
  %195 = vmatprep.subr.mxu0 0.0
  %196 = vmatpush1.msra.mxu0 0.0
  %197 = vmatprep.subr.mxu0 0.0
  %198 = vmatpush1.msra.mxu0 0.0
  %199 = vmatprep.subr.mxu0 0.0
  %200 = vmatpush1.msra.mxu0 0.0
  %201 = vmatprep.subr.mxu0 0.0
  %202 = vmatpush1.msra.mxu0 0.0
  %203 = vmatprep.subr.mxu0 0.0
  %204 = vmatpush1.msra.mxu0 0.0
  %205 = vmatprep.subr.mxu0 0.0
  %206 = vmatpush1.msra.mxu0 0.0
  %207 = vmatprep.subr.mxu0 0.0
  %208 = vmatpush1.msra.mxu0 0.0
  %209 = vmatprep.subr.mxu0 0.0
  %210 = vmatpush1.msra.mxu0 0.0
  %211 = vmatprep.subr.mxu0 0.0
  %212 = vmatpush1.msra.mxu0 0.0
  %213 = vmatprep.subr.mxu0 0.0
  %214 = vmatpush1.msra.mxu0 0.0
  %215 = vmatprep.mubr.f32.mxu0 0.0
  %216 = vmatmul.mubr.f32.gmra.mrb[0].mxu0 %v143
  %v217 = vpop.f32.mrb[0].mxu0
  %v218 = vadd.f32 %v125, %v217
  %v219 = vpop.f32.mrb[0].mxu0
  %220 = vmatprep.mubr.f32.mxu0 0.0
  %221 = vmatmul.mubr.f32.gmra.mrb[0].mxu0 %v145
  %v222 = vpop.f32.mrb[0].mxu0
  %v223 = vadd.f32 %v130, %v222
  %v224 = vpop.f32.mrb[0].mxu0
  %225 = vmatprep.mubr.f32.mxu0 0.0
  %226 = vmatmul.mubr.f32.gmra.mrb[0].mxu0 %v147
  %v227 = vpop.f32.mrb[0].mxu0
  %v228 = vadd.f32 %v135, %v227
  %v229 = vpop.f32.mrb[0].mxu0
  %230 = vmatprep.mubr.f32.mxu0 0.0
  %231 = vmatmul.mubr.f32.gmra.mrb[0].mxu0 %v149
  %v232 = vpop.f32.mrb[0].mxu0
  %v233 = vadd.f32 %v140, %v232
  %v234 = vpop.f32.mrb[0].mxu0
  %235 = vdwg.mxu0
  %vm236 = vcmask 1045504
  %v237 = vrot.slane %v20, 2
  %v238 = vrot.slane %v21, 2
  %v239 = vsel %vm236, %v237, %v238
  %v240 = vrot.slane %v22, 2
  %v241 = vsel %vm236, %v238, %v240
  %v242 = vrot.slane %v23, 2
  %v243 = vsel %vm236, %v240, %v242
  %v246 = vsel %vm236, %v242, %v237
  %s247 = scalar_lea.vmem %s1, 64
  %v248 = vld [vmem:[%s247] sm:$0xff]
  %v249 = vld [vmem:[%s247 + $0x8] sm:$0xff]
  %v250 = vld [vmem:[%s247 + $0x10] sm:$0xff]
  %v251 = vld [vmem:[%s247 + $0x18] sm:$0xff]
  %v252 = vsel %vm48, %v239, 0
  %v254 = vsel %vm48, %v241, 0
  %v256 = vsel %vm48, %v243, 0
  %v259 = vsel %vm48, %v246, 0
  %261 = vmatprep.subr.mxu0 0.0
  %262 = vmatpush1.msra.mxu0 %v248
  %263 = vmatprep.subr.mxu0 0.0
  %264 = vmatpush1.msra.mxu0 %v249
  %265 = vmatprep.subr.mxu0 0.0
  %266 = vmatpush1.msra.mxu0 %v250
  %267 = vmatprep.subr.mxu0 0.0
  %268 = vmatpush1.msra.mxu0 %v251
  %269 = vmatprep.subr.mxu0 0.0
  %270 = vmatpush1.msra.mxu0 0.0
  %271 = vmatprep.subr.mxu0 0.0
  %272 = vmatpush1.msra.mxu0 0.0
  %273 = vmatprep.subr.mxu0 0.0
  %274 = vmatpush1.msra.mxu0 0.0
  %275 = vmatprep.subr.mxu0 0.0
  %276 = vmatpush1.msra.mxu0 0.0
  %277 = vmatprep.subr.mxu0 0.0
  %278 = vmatpush1.msra.mxu0 0.0
  %279 = vmatprep.subr.mxu0 0.0
  %280 = vmatpush1.msra.mxu0 0.0
  %281 = vmatprep.subr.mxu0 0.0
  %282 = vmatpush1.msra.mxu0 0.0
  %283 = vmatprep.subr.mxu0 0.0
  %284 = vmatpush1.msra.mxu0 0.0
  %285 = vmatprep.subr.mxu0 0.0
  %286 = vmatpush1.msra.mxu0 0.0
  %287 = vmatprep.subr.mxu0 0.0
  %288 = vmatpush1.msra.mxu0 0.0
  %289 = vmatprep.subr.mxu0 0.0
  %290 = vmatpush1.msra.mxu0 0.0
  %291 = vmatprep.subr.mxu0 0.0
  %292 = vmatpush1.msra.mxu0 0.0
  %293 = vmatprep.subr.mxu0 0.0
  %294 = vmatpush1.msra.mxu0 0.0
  %295 = vmatprep.subr.mxu0 0.0
  %296 = vmatpush1.msra.mxu0 0.0
  %297 = vmatprep.subr.mxu0 0.0
  %298 = vmatpush1.msra.mxu0 0.0
  %299 = vmatprep.subr.mxu0 0.0
  %300 = vmatpush1.msra.mxu0 0.0
  %301 = vmatprep.subr.mxu0 0.0
  %302 = vmatpush1.msra.mxu0 0.0
  %303 = vmatprep.subr.mxu0 0.0
  %304 = vmatpush1.msra.mxu0 0.0
  %305 = vmatprep.subr.mxu0 0.0
  %306 = vmatpush1.msra.mxu0 0.0
  %307 = vmatprep.subr.mxu0 0.0
  %308 = vmatpush1.msra.mxu0 0.0
  %309 = vmatprep.subr.mxu0 0.0
  %310 = vmatpush1.msra.mxu0 0.0
  %311 = vmatprep.subr.mxu0 0.0
  %312 = vmatpush1.msra.mxu0 0.0
  %313 = vmatprep.subr.mxu0 0.0
  %314 = vmatpush1.msra.mxu0 0.0
  %315 = vmatprep.subr.mxu0 0.0
  %316 = vmatpush1.msra.mxu0 0.0
  %317 = vmatprep.subr.mxu0 0.0
  %318 = vmatpush1.msra.mxu0 0.0
  %319 = vmatprep.subr.mxu0 0.0
  %320 = vmatpush1.msra.mxu0 0.0
  %321 = vmatprep.subr.mxu0 0.0
  %322 = vmatpush1.msra.mxu0 0.0
  %323 = vmatprep.subr.mxu0 0.0
  %324 = vmatpush1.msra.mxu0 0.0
  %325 = vmatprep.mubr.f32.mxu0 0.0
  %326 = vmatmul.mubr.f32.gmra.mrb[0].mxu0 %v252
  %v327 = vpop.f32.mrb[0].mxu0
  %v328 = vadd.f32 0.0, %v327
  %v329 = vpop.f32.mrb[0].mxu0
  %330 = vmatprep.mubr.f32.mxu0 0.0
  %331 = vmatmul.mubr.f32.gmra.mrb[0].mxu0 %v254
  %v332 = vpop.f32.mrb[0].mxu0
  %v333 = vadd.f32 0.0, %v332
  %v334 = vpop.f32.mrb[0].mxu0
  %335 = vmatprep.mubr.f32.mxu0 0.0
  %336 = vmatmul.mubr.f32.gmra.mrb[0].mxu0 %v256
  %v337 = vpop.f32.mrb[0].mxu0
  %v338 = vadd.f32 0.0, %v337
  %v339 = vpop.f32.mrb[0].mxu0
  %340 = vmatprep.mubr.f32.mxu0 0.0
  %341 = vmatmul.mubr.f32.gmra.mrb[0].mxu0 %v259
  %v342 = vpop.f32.mrb[0].mxu0
  %v343 = vadd.f32 0.0, %v342
  %v344 = vpop.f32.mrb[0].mxu0
  %345 = vdwg.mxu0
  %v346 = vadd.f32 %v218, %v328
  %v347 = vadd.f32 %v223, %v333
  %v348 = vadd.f32 %v228, %v338
  %v349 = vadd.f32 %v233, %v343
  %v350 = vld [vmem:[%s2] sm:$0x1]
  %v352 = vlaneseq
  %v353 = vshrl.u32 %v352, 7
  %v354 = vsub.s32 0, %v353
  %v355 = vrot.slane %v350, %v354
  %v357 = vadd.f32 %v346, %v355
  %v358 = vadd.f32 %v347, %v355
  %v359 = vadd.f32 %v348, %v355
  %v360 = vadd.f32 %v349, %v355
  %v361 = vmax.f32 %v357, 0.0
  %v362 = vmax.f32 %v358, 0.0
  %v363 = vmax.f32 %v359, 0.0
  %v364 = vmax.f32 %v360, 0.0
  %v365 = vlaneseq
  %v366 = vshrl.u32 %v365, 7
  %v367 = vadd.s32 %v366, 8
  %vm368 = vcmp.lt.s32.totalorder %v366, 14
  %vm369 = vcmp.lt.s32.totalorder %v367, 14
  %v370 = vsel %vm368, %v361, 0.0
  %v371 = vsel %vm369, %v362, 0.0
  %v372 = vsel %vm368, %v363, 0.0
  %v373 = vsel %vm369, %v364, 0.0
  %v374 = vmax.f32 %v370, %v371
  %v375 = vrot.slane %v374, 4
  %v376 = vmax.f32 %v374, %v375
  %v377 = vrot.slane %v376, 2
  %v378 = vmax.f32 %v376, %v377
  %v379 = vrot.slane %v378, 1
  %v380 = vmax.f32 %v378, %v379
  %v381 = vmax.f32 %v372, %v373
  %v382 = vrot.slane %v381, 4
  %v383 = vmax.f32 %v381, %v382
  %v384 = vrot.slane %v383, 2
  %v385 = vmax.f32 %v383, %v384
  %v386 = vrot.slane %v385, 1
  %v387 = vmax.f32 %v385, %v386
  %vm390 = vcmask 1041409
  %v391 = vsel %vm390, %v387, %v380
  %vm393 = vcmask 1041408
  %v394 = vsel %vm393, %v391, 0.0
  %v395 = vld [vmem:[%s3] sm:$0xff]
  %v396 = vld [vmem:[%s3 + $0x8] sm:$0xff]
  %v397 = vld [vmem:[%s3 + $0x10] sm:$0xff]
  %v398 = vld [vmem:[%s3 + $0x18] sm:$0xff]
  %v399 = vld [vmem:[%s3 + $0x20] sm:$0xff]
  %v400 = vld [vmem:[%s3 + $0x28] sm:$0xff]
  %v401 = vld [vmem:[%s3 + $0x30] sm:$0xff]
  %v402 = vld [vmem:[%s3 + $0x38] sm:$0xff]
  %v403 = vld [vmem:[%s3 + $0x40] sm:$0xff]
  %v404 = vld [vmem:[%s3 + $0x48] sm:$0xff]
  %v405 = vld [vmem:[%s3 + $0x50] sm:$0xff]
  %v406 = vld [vmem:[%s3 + $0x58] sm:$0xff]
  %v407 = vld [vmem:[%s3 + $0x60] sm:$0xff]
  %v408 = vld [vmem:[%s3 + $0x68] sm:$0xff]
  %v409 = vld [vmem:[%s3 + $0x70] sm:$0xff]
  %v410 = vld [vmem:[%s3 + $0x78] sm:$0xff]
  %v411 = vld [vmem:[%s4] sm:$0x1]
  %v413 = vlaneseq
  %v414 = vshrl.u32 %v413, 7
  %v415 = vsub.s32 0, %v414
  %v416 = vrot.slane %v411, %v415
  %418 = vmatprep.subr.mxu0 0.0
  %419 = vmatpush1.msra.mxu0 %v395
  %420 = vmatprep.subr.mxu0 0.0
  %421 = vmatpush1.msra.mxu0 %v396
  %422 = vmatprep.subr.mxu0 0.0
  %423 = vmatpush1.msra.mxu0 %v397
  %424 = vmatprep.subr.mxu0 0.0
  %425 = vmatpush1.msra.mxu0 %v398
  %426 = vmatprep.subr.mxu0 0.0
  %427 = vmatpush1.msra.mxu0 %v399
  %428 = vmatprep.subr.mxu0 0.0
  %429 = vmatpush1.msra.mxu0 %v400
  %430 = vmatprep.subr.mxu0 0.0
  %431 = vmatpush1.msra.mxu0 %v401
  %432 = vmatprep.subr.mxu0 0.0
  %433 = vmatpush1.msra.mxu0 %v402
  %434 = vmatprep.subr.mxu0 0.0
  %435 = vmatpush1.msra.mxu0 %v403
  %436 = vmatprep.subr.mxu0 0.0
  %437 = vmatpush1.msra.mxu0 %v404
  %438 = vmatprep.subr.mxu0 0.0
  %439 = vmatpush1.msra.mxu0 %v405
  %440 = vmatprep.subr.mxu0 0.0
  %441 = vmatpush1.msra.mxu0 %v406
  %442 = vmatprep.subr.mxu0 0.0
  %443 = vmatpush1.msra.mxu0 %v407
  %444 = vmatprep.subr.mxu0 0.0
  %445 = vmatpush1.msra.mxu0 %v408
  %446 = vmatprep.subr.mxu0 0.0
  %447 = vmatpush1.msra.mxu0 %v409
  %448 = vmatprep.subr.mxu0 0.0
  %449 = vmatpush1.msra.mxu0 %v410
  %450 = vmatprep.subr.mxu0 0.0
  %451 = vmatpush1.msra.mxu0 0.0
  %452 = vmatprep.subr.mxu0 0.0
  %453 = vmatpush1.msra.mxu0 0.0
  %454 = vmatprep.subr.mxu0 0.0
  %455 = vmatpush1.msra.mxu0 0.0
  %456 = vmatprep.subr.mxu0 0.0
  %457 = vmatpush1.msra.mxu0 0.0
  %458 = vmatprep.subr.mxu0 0.0
  %459 = vmatpush1.msra.mxu0 0.0
  %460 = vmatprep.subr.mxu0 0.0
  %461 = vmatpush1.msra.mxu0 0.0
  %462 = vmatprep.subr.mxu0 0.0
  %463 = vmatpush1.msra.mxu0 0.0
  %464 = vmatprep.subr.mxu0 0.0
  %465 = vmatpush1.msra.mxu0 0.0
  %466 = vmatprep.subr.mxu0 0.0
  %467 = vmatpush1.msra.mxu0 0.0
  %468 = vmatprep.subr.mxu0 0.0
  %469 = vmatpush1.msra.mxu0 0.0
  %470 = vmatprep.subr.mxu0 0.0
  %471 = vmatpush1.msra.mxu0 0.0
  %472 = vmatprep.subr.mxu0 0.0
  %473 = vmatpush1.msra.mxu0 0.0
  %474 = vmatprep.subr.mxu0 0.0
  %475 = vmatpush1.msra.mxu0 0.0
  %476 = vmatprep.subr.mxu0 0.0
  %477 = vmatpush1.msra.mxu0 0.0
  %478 = vmatprep.subr.mxu0 0.0
  %479 = vmatpush1.msra.mxu0 0.0
  %480 = vmatprep.subr.mxu0 0.0
  %481 = vmatpush1.msra.mxu0 0.0
  %482 = vmatprep.mubr.f32.mxu0 0.0
  %483 = vmatmul.mubr.f32.gmra.mrb[0].mxu0 %v394
  %v484 = vpop.f32.mrb[0].mxu0
  %v485 = vadd.f32 %v416, %v484
  %v486 = vpop.f32.mrb[0].mxu0
  %487 = vdwg.mxu0
  %488 = vmax.xlane.f32.xlu0 %v485
  %v489 = vpop.xlane.xlu0 %488
  %v490 = vsub.f32 %v485, %v489
  %v491 = vmul.f32 %v490, 1.442695
  %v492 = vpow.pop %v491
  %493 = vadd.xlane.f32.xlu0 %v492
  %v494 = vpop.xlane.xlu0 %493
  %v495 = vlog2.pop %v494
  %v496 = vmul.f32 %v495, 0.6931472
  %v497 = vadd.f32 %v496, %v489
  %v498 = vsub.f32 %v485, %v497
  %499 = vst [vmem:[%s5] sm:$0xff] %v498
  // Predicated region
  $region22: #{cnn_classifier.1} parent=0 // pred_check
    _
  $region23: #{cnn_classifier.1} parent=0 // pred_check_branch
    %501 = sbr.rel (0) target = $region25
  $region24: #{cnn_classifier.1} parent=0 // pred_region
    _
  $region25: #{cnn_classifier.1} parent=0 // pred_fallthru
    _
  // Predicated region
  $region26: #{cnn_classifier.1} parent=0 // pred_check
    _
  $region27: #{cnn_classifier.1} parent=0 // pred_check_branch
    %503 = sbr.rel (0) target = $region29
  $region28: #{cnn_classifier.1} parent=0 // pred_region
    _
  $region29: #{cnn_classifier.1} parent=0 // pred_fallthru
    _

</llo_original>
